<compile_context>
chip_gen: v5e
topology: v5e:2x2
jax: 0.10.0
libtpu: 0.0.40
codegen_flags: <defaults>
</compile_context>

<pallas_src>
import functools

import jax
import jax.numpy as jnp
from jax import lax
from jax.experimental import pallas as pl
from jax.experimental.pallas import tpu as pltpu


def _pad128(n):
    return ((n + 127) // 128) * 128


def _round_up(n, m):
    return ((n + m - 1) // m) * m


def _group_levels(counts):
    """Group consecutive levels so every kernel output starts at a 128-aligned
    column offset (lane-dense, unmasked stores).

    Returns (group_offsets, group_counts, group_members) where
    group_members[g] = tuple of (level_index, local_offset, level_count)."""
    groups_off, groups_cnt, groups_members = [], [], []
    cur_off, cur_cnt, cur_members = 0, 0, []
    running = 0
    n = len(counts)
    for li, c in enumerate(counts):
        cur_members.append((li, cur_cnt, c))
        cur_cnt += c
        running += c
        if li == n - 1 or running % 128 == 0:
            groups_off.append(cur_off)
            groups_cnt.append(cur_cnt)
            groups_members.append(tuple(cur_members))
            cur_off, cur_cnt, cur_members = running, 0, []
    return tuple(groups_off), tuple(groups_cnt), tuple(groups_members)


def _make_split_kernel(group_offsets, group_counts):
    """Copy static, lane-aligned column ranges of the fused row-tile into the
    grouped outputs."""

    def kernel(x_ref, *out_refs):
        for o_ref, off, cnt in zip(out_refs, group_offsets, group_counts):
            o_ref[...] = x_ref[:, off:off + cnt]

    return kernel


@functools.partial(
    jax.jit, static_argnames=("original_sizes", "block_m", "min_pallas_bytes"))
def feature_split(fused_map, original_sizes, *, block_m=1024,
                  min_pallas_bytes=1 << 20):
    """Pallas equivalent of FeatureSplit.forward.

    fused_map: (B, C, total_pixels) with total_pixels == sum_i h_i * w_i
    original_sizes: static tuple of 5 (n, c, h, w) tuples
    returns: tuple of 5 arrays, each (B, C, h_i, w_i)
    """
    assert len(original_sizes) == 5, "Expected 5 sizes for original feature maps"
    B, C, total = fused_map.shape
    counts = tuple(int(s[2]) * int(s[3]) for s in original_sizes)
    assert sum(counts) == total, "pixel counts must sum to fused width"

    offsets = [0]
    for c in counts[:-1]:
        offsets.append(offsets[-1] + c)

    M = B * C
    itemsize = jnp.dtype(fused_map.dtype).itemsize
    total_bytes = M * total * itemsize

    # --- small-input fast path -------------------------------------------
    # A grid=(1,) pallas_call is pure launch/DMA-setup overhead; XLA slices
    # already read each byte exactly once in aggregate.
    if total_bytes < min_pallas_bytes:
        return tuple(
            fused_map[:, :, off:off + cnt].reshape(B, C, int(s[2]), int(s[3]))
            for off, cnt, s in zip(offsets, counts, original_sizes))

    # --- Pallas path -------------------------------------------------------
    x2d = fused_map.reshape(M, total)
    group_off, group_cnt, group_members = _group_levels(counts)

    # Sublane packing per dtype: f32 -> 8, bf16/f16 -> 16, int8/fp8 -> 32.
    packing = max(8, 32 // itemsize)

    # Per-generation VMEM budget (v5e/v6e: 128 MiB physical, v7x: 64 MiB).
    try:
        vmem_cap = int(pltpu.get_tpu_info().vmem_capacity_bytes)
    except Exception:  # conservative fallback (v7x per-TC)
        vmem_cap = 64 * 1024 * 1024
    vmem_limit = min(vmem_cap // 2, 64 * 1024 * 1024)

    # Double-buffered, lane-padded bytes per tile row (input + grouped outputs).
    row_bytes = 2 * itemsize * (_pad128(total) + sum(_pad128(c) for c in group_cnt))
    max_rows = max(packing, (3 * vmem_limit // 4) // row_bytes)

    bm = min(block_m, M, max_rows)
    if bm >= M:
        bm = M                                   # full dim: always legal
    else:
        bm = max(packing, (bm // packing) * packing)

    # v7x has 2 TensorCores: guarantee >= 2 "parallel" grid steps when the copy
    # is large enough that the extra ~0.35us per-step overhead is negligible.
    if total_bytes >= (4 << 20) and M >= 2 * packing:
        bm = min(bm, _round_up(-(-M // 2), packing))

    grid = (pl.cdiv(M, bm),)

    out_shapes = tuple(
        jax.ShapeDtypeStruct((M, c), fused_map.dtype) for c in group_cnt)

    cost = pl.CostEstimate(
        flops=0, transcendentals=0,
        bytes_accessed=2 * M * total * itemsize)

    outs2d = pl.pallas_call(
        _make_split_kernel(group_off, group_cnt),
        out_shape=out_shapes,
        grid_spec=pltpu.PrefetchScalarGridSpec(
            num_scalar_prefetch=0,
            grid=grid,
            in_specs=[pl.BlockSpec((bm, total), lambda i: (i, 0))],
            out_specs=tuple(
                pl.BlockSpec((bm, c), lambda i: (i, 0)) for c in group_cnt),
        ),
        compiler_params=pltpu.CompilerParams(
            dimension_semantics=("parallel",),
            vmem_limit_bytes=int(vmem_limit)),
        cost_estimate=cost,
    )(x2d)

    # Un-group the lane-aligned tail(s) in the wrapper (cheap XLA slices over a
    # small fraction of the bytes) and do the metadata-only per-level reshape.
    results = [None] * 5
    for g_out, members in zip(outs2d, group_members):
        if len(members) == 1:
            li, _, _ = members[0]
            s = original_sizes[li]
            results[li] = g_out.reshape(B, C, int(s[2]), int(s[3]))
        else:
            for li, loc_off, c in members:
                s = original_sizes[li]
                piece = lax.slice_in_dim(g_out, loc_off, loc_off + c, axis=1)
                results[li] = piece.reshape(B, C, int(s[2]), int(s[3]))
    return tuple(results)


def _reference(fused_map, original_sizes):
    """Pure-JAX reference mirroring the PyTorch module."""
    counts = [int(s[2]) * int(s[3]) for s in original_sizes]
    offs = [0]
    for c in counts[:-1]:
        offs.append(offs[-1] + c)
    B, C, _ = fused_map.shape
    res = []
    for off, cnt, s in zip(offs, counts, original_sizes):
        piece = fused_map[:, :, off:off + cnt]
        res.append(piece.reshape(B, C, int(s[2]), int(s[3])))
    return tuple(res)


if __name__ == "__main__":
    batch, channels = 2, 4
    # 5-level feature pyramid (16x16 down to 1x1), consistent with the module.
    original_sizes = (
        (batch, channels, 16, 16),
        (batch, channels, 8, 8),
        (batch, channels, 4, 4),
        (batch, channels, 2, 2),
        (batch, channels, 1, 1),
    )
    total_pixels = sum(h * w for (_, _, h, w) in original_sizes)  # 341

    key = jax.random.PRNGKey(0)
    fused_map = jax.random.normal(
        key, (batch, channels, total_pixels), dtype=jnp.float32)

    # Force the Pallas path even at this tiny size so the kernel is exercised.
    outs = feature_split(fused_map, original_sizes, min_pallas_bytes=0)
    outs = jax.block_until_ready(outs)

    # Default call (small-input fast path) must agree as well.
    outs_fast = jax.block_until_ready(feature_split(fused_map, original_sizes))

    refs = _reference(fused_map, original_sizes)

    assert len(outs) == 5
    for o, f, r, s in zip(outs, outs_fast, refs, original_sizes):
        assert o.shape == (batch, channels, s[2], s[3]), o.shape
        assert jnp.array_equal(o, r), "pallas path mismatch vs reference"
        assert jnp.array_equal(f, r), "fast path mismatch vs reference"

    print("KERNEL_OK")
</pallas_src>

<mosaic_0001>
module attributes {stable_mosaic.version = 11 : i64} {
  func.func @kernel(%arg0: i32, %arg1: memref<8x341xf32, #tpu.memory_space<vmem>>, %arg2: memref<8x256xf32, #tpu.memory_space<vmem>>, %arg3: memref<8x85xf32, #tpu.memory_space<vmem>>) attributes {dimension_semantics = [#tpu.dimension_semantics<parallel>], iteration_bounds = array<i64: 1>, scalar_prefetch = 0 : i64, scratch_operands = 0 : i64, tpu.core_type = #tpu.core_type<tc>, window_params = [{transform_indices = @transform_0, window_bounds = array<i64: 8, 341>}, {transform_indices = @transform_1, window_bounds = array<i64: 8, 256>}, {transform_indices = @transform_2, window_bounds = array<i64: 8, 85>}]} {
    %c0 = arith.constant 0 : index
    %c0_0 = arith.constant 0 : index
    %0 = vector.load %arg1[%c0, %c0_0] : memref<8x341xf32, #tpu.memory_space<vmem>>, vector<8x256xf32>
    %c0_1 = arith.constant 0 : index
    %c0_2 = arith.constant 0 : index
    %1 = vector.load %arg2[%c0_1, %c0_2] : memref<8x256xf32, #tpu.memory_space<vmem>>, vector<8x256xf32>
    tpu.vector_store %arg2[%c0_1, %c0_2], %0 {strides = array<i32>} : memref<8x256xf32, #tpu.memory_space<vmem>>, vector<8x256xf32>,
    %c0_3 = arith.constant 0 : index
    %c256 = arith.constant 256 : index
    %2 = vector.load %arg1[%c0_3, %c256] : memref<8x341xf32, #tpu.memory_space<vmem>>, vector<8x85xf32>
    %c0_4 = arith.constant 0 : index
    %c0_5 = arith.constant 0 : index
    %3 = vector.load %arg3[%c0_4, %c0_5] : memref<8x85xf32, #tpu.memory_space<vmem>>, vector<8x85xf32>
    tpu.vector_store %arg3[%c0_4, %c0_5], %2 {strides = array<i32>} : memref<8x85xf32, #tpu.memory_space<vmem>>, vector<8x85xf32>,
    return
  }
  func.func @transform_0(%arg0: i32) -> (i32, i32) {
    %c0_i32 = arith.constant 0 : i32
    %c0_i32_0 = arith.constant 0 : i32
    return %arg0, %c0_i32 : i32, i32
  }
  func.func @transform_1(%arg0: i32) -> (i32, i32) {
    %c0_i32 = arith.constant 0 : i32
    %c0_i32_0 = arith.constant 0 : i32
    return %arg0, %c0_i32 : i32, i32
  }
  func.func @transform_2(%arg0: i32) -> (i32, i32) {
    %c0_i32 = arith.constant 0 : i32
    %c0_i32_0 = arith.constant 0 : i32
    return %arg0, %c0_i32 : i32, i32
  }
}

</mosaic_0001>

<llo_original>
// kernel: feature_split.1
$region0: #{feature_split.1}
  #allocation0 [shape = 'u32[]', space=smem, size = 0x4, offset = 0x4, fixed_abs, tag = 'smem constant byte address 0x4 - core index']
  #allocation1 [shape = 'u32[72,128]{1,0:T(1,128)}', space=vmem, size = 0x9000, scoped, tag = 'internal scratch']
  %s0 = inlined_call_operand.vmem [shape: f32[8,341], index: 0, kind: input, shape index: {}]
  %s1 = inlined_call_operand.vmem [shape: f32[8,256], index: 1, kind: output, shape index: {0}]
  %s2 = inlined_call_operand.vmem [shape: f32[8,85], index: 2, kind: output, shape index: {1}]
  %3 = xla_tuple %s1, %s2
  %s4 = sld [smem:[#allocation0]]
  $region22: #{feature_split.1} parent=0
    _
  %s6 = ssub.s32 1, %s4
  %s7 = scalar_select 0, %s6, %s4
  // Predicated region
  $region2: #{feature_split.1} parent=0 // pred_check
    _
  $region3: #{feature_split.1} parent=0 // pred_check_branch
    %9 = sbr.rel (0) target = $region5
  $region4: #{feature_split.1} parent=0 // pred_region
    _
  $region5: #{feature_split.1} parent=0 // pred_fallthru
    _
  %v10 = vld [vmem:[%s0] sm:$0xff]
  %v11 = vld [vmem:[%s0 + $0x8] sm:$0xff]
  %12 = vst [vmem:[%s1] sm:$0xff] %v10
  %13 = vst [vmem:[%s1 + $0x8] sm:$0xff] %v11
  %v14 = vld [vmem:[%s0 + $0x10] sm:$0xff]
  %vm15 = vcmask 695296
  %16 = vst.msk [vmem:[%s2] sm:$0xff] %vm15, %v14
  // Predicated region
  $region6: #{feature_split.1} parent=0 // pred_check
    _
  $region7: #{feature_split.1} parent=0 // pred_check_branch
    %18 = sbr.rel (0) target = $region9
  $region8: #{feature_split.1} parent=0 // pred_region
    _
  $region9: #{feature_split.1} parent=0 // pred_fallthru
    _
  // Predicated region
  $region10: #{feature_split.1} parent=0 // pred_check
    _
  $region11: #{feature_split.1} parent=0 // pred_check_branch
    %20 = sbr.rel (0) target = $region13
  $region12: #{feature_split.1} parent=0 // pred_region
    _
  $region13: #{feature_split.1} parent=0 // pred_fallthru
    _
  // Predicated region
  $region14: #{feature_split.1} parent=0 // pred_check
    _
  $region15: #{feature_split.1} parent=0 // pred_check_branch
    %22 = sbr.rel (0) target = $region17
  $region16: #{feature_split.1} parent=0 // pred_region
    _
  $region17: #{feature_split.1} parent=0 // pred_fallthru
    _
  // Predicated region
  $region18: #{feature_split.1} parent=0 // pred_check
    _
  $region19: #{feature_split.1} parent=0 // pred_check_branch
    %24 = sbr.rel (0) target = $region21
  $region20: #{feature_split.1} parent=0 // pred_region
    _
  $region21: #{feature_split.1} parent=0 // pred_fallthru
    _

</llo_original>
